<compile_context>
chip_gen: v7x
topology: tpu7x:2x2x1
jax: 0.10.0
libtpu: 0.0.40
codegen_flags: <defaults>
</compile_context>

<pallas_src>
import jax
import jax.numpy as jnp
from jax.experimental import pallas as pl
from jax.experimental.pallas import tpu as pltpu

FEATURE_DIM = 16
ACTION_DIM = 8
HIDDEN = 256
BATCH = 2

SUBLANE = 8


def _round_up(x, m):
    return (x + m - 1) // m * m


def _icm_kernel(cur_ref, nxt_ref, w1a_ref, w1b_ref, b1_ref, w2_ref, b2_ref,
                out_ref):
    # Layer 1: concat fused away -> two K=F MXU pushes, f32 accumulation.
    h = (jnp.dot(cur_ref[...], w1a_ref[...], preferred_element_type=jnp.float32)
         + jnp.dot(nxt_ref[...], w1b_ref[...], preferred_element_type=jnp.float32)
         + b1_ref[...])
    h = jnp.maximum(h, 0.0)                         # ReLU in f32 (VPU, v5e-safe)
    # Layer 2: narrow (A-lane) output, f32 accumulation; masked store is cheap.
    y = jnp.dot(h.astype(w2_ref.dtype), w2_ref[...],
                preferred_element_type=jnp.float32) + b2_ref[...]
    out_ref[...] = y.astype(out_ref.dtype)


def prepare_params(params, feature_dim, compute_dtype=jnp.float32):
    """One-time prep: split w1 for the fused-concat kernel, reshape biases,
    cast matmul operands to the compute dtype (biases stay f32)."""
    w1, b1, w2, b2 = params["w1"], params["b1"], params["w2"], params["b2"]
    H = w1.shape[1]
    A = w2.shape[1]
    return {
        "w1a": w1[:feature_dim].astype(compute_dtype),
        "w1b": w1[feature_dim:].astype(compute_dtype),
        "b1": b1.reshape(1, H).astype(jnp.float32),
        "w2": w2.astype(compute_dtype),
        "b2": b2.reshape(1, A).astype(jnp.float32),
    }


def icm_inverse_model(current_features, next_features, prep, *,
                      tile_b=1024, small_b=256):
    """Pallas forward for ICMInverseModel.

    current_features, next_features: [B, F]
    prep: output of prepare_params()
    returns: [B, A] float32
    """
    B, F = current_features.shape
    w1a, w1b, b1, w2, b2 = prep["w1a"], prep["w1b"], prep["b1"], prep["w2"], prep["b2"]
    H = w1a.shape[1]
    A = w2.shape[1]

    cdt = w1a.dtype
    cur = current_features.astype(cdt)
    nxt = next_features.astype(cdt)

    if B <= small_b:
        # ---- Single-block latency path: no grid, everything VMEM-resident. ----
        return pl.pallas_call(
            _icm_kernel,
            out_shape=jax.ShapeDtypeStruct((B, A), jnp.float32),
            in_specs=[pl.BlockSpec(memory_space=pltpu.MemorySpace.VMEM)] * 7,
            out_specs=pl.BlockSpec(memory_space=pltpu.MemorySpace.VMEM),
        )(cur, nxt, w1a, w1b, b1, w2, b2)

    # ---- Batched path: tile the batch axis, weights stay VMEM-resident. ----
    # Guarantee >= 2 grid steps so v7x's two TensorCores both get work.
    tb = min(tile_b, _round_up(pl.cdiv(B, 2), 256))
    tb = max(tb, 256)
    grid = (pl.cdiv(B, tb),)   # partial last block handled by Pallas clipping

    return pl.pallas_call(
        _icm_kernel,
        out_shape=jax.ShapeDtypeStruct((B, A), jnp.float32),
        grid_spec=pltpu.PrefetchScalarGridSpec(
            num_scalar_prefetch=0,
            grid=grid,
            in_specs=[
                pl.BlockSpec((tb, F), lambda i: (i, 0)),   # cur
                pl.BlockSpec((tb, F), lambda i: (i, 0)),   # nxt
                pl.BlockSpec((F, H), lambda i: (0, 0)),    # w1a (resident)
                pl.BlockSpec((F, H), lambda i: (0, 0)),    # w1b (resident)
                pl.BlockSpec((1, H), lambda i: (0, 0)),    # b1
                pl.BlockSpec((H, A), lambda i: (0, 0)),    # w2
                pl.BlockSpec((1, A), lambda i: (0, 0)),    # b2
            ],
            out_specs=pl.BlockSpec((tb, A), lambda i: (i, 0)),
        ),
        compiler_params=pltpu.CompilerParams(
            dimension_semantics=("parallel",)),            # megacore sharding
    )(cur, nxt, w1a, w1b, b1, w2, b2)


def init_params(key, feature_dim, action_dim, hidden=HIDDEN):
    # Deterministic synthetic init (PyTorch-style uniform bounds).
    k1, k2, k3, k4 = jax.random.split(key, 4)
    in1 = feature_dim * 2
    bound1 = 1.0 / jnp.sqrt(in1)
    bound2 = 1.0 / jnp.sqrt(hidden)
    return {
        "w1": jax.random.uniform(k1, (in1, hidden), jnp.float32, -bound1, bound1),
        "b1": jax.random.uniform(k2, (hidden,), jnp.float32, -bound1, bound1),
        "w2": jax.random.uniform(k3, (hidden, action_dim), jnp.float32, -bound2, bound2),
        "b2": jax.random.uniform(k4, (action_dim,), jnp.float32, -bound2, bound2),
    }


def _reference(cur, nxt, params):
    x = jnp.concatenate([cur, nxt], axis=-1)
    h = jnp.maximum(x @ params["w1"] + params["b1"], 0.0)
    return h @ params["w2"] + params["b2"]


if __name__ == "__main__":
    key = jax.random.PRNGKey(0)
    kp, kc, kn = jax.random.split(key, 3)
    params = init_params(kp, FEATURE_DIM, ACTION_DIM)
    prep_f32 = prepare_params(params, FEATURE_DIM, jnp.float32)

    # Small case (matches the PyTorch module spec): single-block latency path.
    cur = jax.random.normal(kc, (BATCH, FEATURE_DIM), jnp.float32)
    nxt = jax.random.normal(kn, (BATCH, FEATURE_DIM), jnp.float32)
    out = jax.block_until_ready(icm_inverse_model(cur, nxt, prep_f32))
    ref = _reference(cur, nxt, params)
    assert out.shape == (BATCH, ACTION_DIM)
    assert jnp.allclose(out, ref, atol=1e-4, rtol=1e-4)

    # Larger batch exercises the tiled / megacore-parallel path, including a
    # partial final block (600 = 512 + 88, grid of 2 steps).
    kc2, kn2 = jax.random.split(jax.random.PRNGKey(1))
    Bb = 600
    curb = jax.random.normal(kc2, (Bb, FEATURE_DIM), jnp.float32)
    nxtb = jax.random.normal(kn2, (Bb, FEATURE_DIM), jnp.float32)
    outb = jax.block_until_ready(icm_inverse_model(curb, nxtb, prep_f32))
    refb = _reference(curb, nxtb, params)
    assert outb.shape == (Bb, ACTION_DIM)
    assert jnp.allclose(outb, refb, atol=1e-4, rtol=1e-4)

    # bf16 operand path (f32 accumulation / bias / ReLU) at looser tolerance.
    prep_bf16 = prepare_params(params, FEATURE_DIM, jnp.bfloat16)
    outh = jax.block_until_ready(icm_inverse_model(cur, nxt, prep_bf16))
    assert outh.shape == (BATCH, ACTION_DIM)
    assert jnp.allclose(outh, ref, atol=5e-2, rtol=5e-2)

    print("KERNEL_OK")
</pallas_src>

<mosaic_0001>
module attributes {stable_mosaic.version = 11 : i64} {
  func.func @_icm_kernel(%arg0: memref<2x16xf32, #tpu.memory_space<vmem>>, %arg1: memref<2x16xf32, #tpu.memory_space<vmem>>, %arg2: memref<16x256xf32, #tpu.memory_space<vmem>>, %arg3: memref<16x256xf32, #tpu.memory_space<vmem>>, %arg4: memref<1x256xf32, #tpu.memory_space<vmem>>, %arg5: memref<256x8xf32, #tpu.memory_space<vmem>>, %arg6: memref<1x8xf32, #tpu.memory_space<vmem>>, %arg7: memref<2x8xf32, #tpu.memory_space<vmem>>) attributes {dimension_semantics = [], scalar_prefetch = 0 : i64, scratch_operands = 0 : i64, tpu.core_type = #tpu.core_type<tc>} {
    %c0 = arith.constant 0 : index
    %c0_0 = arith.constant 0 : index
    %0 = vector.load %arg0[%c0, %c0_0] : memref<2x16xf32, #tpu.memory_space<vmem>>, vector<2x16xf32>
    %c0_1 = arith.constant 0 : index
    %c0_2 = arith.constant 0 : index
    %1 = vector.load %arg2[%c0_1, %c0_2] : memref<16x256xf32, #tpu.memory_space<vmem>>, vector<16x256xf32>
    %cst = arith.constant dense<0.000000e+00> : vector<2x256xf32>
    %2 = tpu.matmul %0, %1, %cst {dimension_numbers = #tpu.dot_dimension_numbers<[1], [0], [0], [1], [0, 0, 1, 1], [], []>} : vector<2x16xf32>, vector<16x256xf32>, vector<2x256xf32> -> vector<2x256xf32>
    %c0_3 = arith.constant 0 : index
    %c0_4 = arith.constant 0 : index
    %3 = vector.load %arg1[%c0_3, %c0_4] : memref<2x16xf32, #tpu.memory_space<vmem>>, vector<2x16xf32>
    %c0_5 = arith.constant 0 : index
    %c0_6 = arith.constant 0 : index
    %4 = vector.load %arg3[%c0_5, %c0_6] : memref<16x256xf32, #tpu.memory_space<vmem>>, vector<16x256xf32>
    %cst_7 = arith.constant dense<0.000000e+00> : vector<2x256xf32>
    %5 = tpu.matmul %3, %4, %cst_7 {dimension_numbers = #tpu.dot_dimension_numbers<[1], [0], [0], [1], [0, 0, 1, 1], [], []>} : vector<2x16xf32>, vector<16x256xf32>, vector<2x256xf32> -> vector<2x256xf32>
    %6 = arith.addf %2, %5 : vector<2x256xf32>
    %c0_8 = arith.constant 0 : index
    %c0_9 = arith.constant 0 : index
    %7 = vector.load %arg4[%c0_8, %c0_9] : memref<1x256xf32, #tpu.memory_space<vmem>>, vector<1x256xf32>
    %8 = vector.broadcast %7 : vector<1x256xf32> to vector<2x256xf32>
    %9 = arith.addf %6, %8 : vector<2x256xf32>
    %cst_10 = arith.constant 0.000000e+00 : f32
    %10 = vector.broadcast %cst_10 : f32 to vector<2x256xf32>
    %11 = arith.maximumf %9, %10 : vector<2x256xf32>
    %c0_11 = arith.constant 0 : index
    %c0_12 = arith.constant 0 : index
    %12 = vector.load %arg5[%c0_11, %c0_12] : memref<256x8xf32, #tpu.memory_space<vmem>>, vector<256x8xf32>
    %cst_13 = arith.constant dense<0.000000e+00> : vector<2x8xf32>
    %13 = tpu.matmul %11, %12, %cst_13 {dimension_numbers = #tpu.dot_dimension_numbers<[1], [0], [0], [1], [0, 0, 1, 1], [], []>} : vector<2x256xf32>, vector<256x8xf32>, vector<2x8xf32> -> vector<2x8xf32>
    %c0_14 = arith.constant 0 : index
    %c0_15 = arith.constant 0 : index
    %14 = vector.load %arg6[%c0_14, %c0_15] : memref<1x8xf32, #tpu.memory_space<vmem>>, vector<1x8xf32>
    %15 = vector.broadcast %14 : vector<1x8xf32> to vector<2x8xf32>
    %16 = arith.addf %13, %15 : vector<2x8xf32>
    %c0_16 = arith.constant 0 : index
    %c0_17 = arith.constant 0 : index
    %17 = vector.load %arg7[%c0_16, %c0_17] : memref<2x8xf32, #tpu.memory_space<vmem>>, vector<2x8xf32>
    tpu.vector_store %arg7[%c0_16, %c0_17], %16 {strides = array<i32>} : memref<2x8xf32, #tpu.memory_space<vmem>>, vector<2x8xf32>,
    return
  }
}

</mosaic_0001>

<llo_original>
// kernel: tpu_custom_call.1
$region0: #{tpu_custom_call.1}
  #allocation0 [shape = 'u32[]', space=smem, size = 0x4, offset = 0x4, fixed_abs, tag = 'smem constant byte address 0x4 - core index']
  #allocation1 [shape = 'u32[144,128]{1,0:T(1,128)}', space=vmem, size = 0x12000, scoped, tag = 'internal scratch']
  %s0 = inlined_call_operand.vmem [shape: f32[2,16], index: 0, kind: input, shape index: {}]
  %s1 = inlined_call_operand.vmem [shape: f32[2,16], index: 1, kind: input, shape index: {}]
  %s2 = inlined_call_operand.vmem [shape: f32[16,256], index: 2, kind: input, shape index: {}]
  %s3 = inlined_call_operand.vmem [shape: f32[16,256], index: 3, kind: input, shape index: {}]
  %s4 = inlined_call_operand.vmem [shape: f32[1,256], index: 4, kind: input, shape index: {}]
  %s5 = inlined_call_operand.vmem [shape: f32[256,8], index: 5, kind: input, shape index: {}]
  %s6 = inlined_call_operand.vmem [shape: f32[1,8], index: 6, kind: input, shape index: {}]
  %s7 = inlined_call_operand.hbm [shape: f32[2,8], index: 7, kind: output, shape index: {}]
  %s8 = sld [smem:[#allocation0]]
  $region38: #{tpu_custom_call.1} parent=0
    _
  %s10 = ssub.s32 1, %s8
  %s11 = scalar_select 0, %s10, %s8
  $region1: #{tpu_custom_call.1} parent=0
    #allocation2 [shape = 'u8[1024]{0}', space=vmem, size = 0x400, scoped, tag = 'output window, operand 0, single buffered']
    #allocation3 [shape = 's32[1]{0}', space=sflag, size = 0x4, scoped, tag = 'scoped memory for tpu_custom_call.1']
    %12 = vsyncpa [#allocation3], 0
    // Predicated region
    $region2: #{tpu_custom_call.1} parent=1 // pred_check
      _
    $region3: #{tpu_custom_call.1} parent=1 // pred_check_branch
      %14 = sbr.rel (0) target = $region5
    $region4: #{tpu_custom_call.1} parent=1 // pred_region
      _
    $region5: #{tpu_custom_call.1} parent=1 // pred_fallthru
      _
    // Predicated region
    $region6: #{tpu_custom_call.1} parent=1 // pred_check
      _
    $region7: #{tpu_custom_call.1} parent=1 // pred_check_branch
      %16 = sbr.rel (0) target = $region9
    $region8: #{tpu_custom_call.1} parent=1 // pred_region
      _
    $region9: #{tpu_custom_call.1} parent=1 // pred_fallthru
      _
    // Predicated region
    $region10: #{tpu_custom_call.1} parent=1 // pred_check
      _
    $region11: #{tpu_custom_call.1} parent=1 // pred_check_branch
      %18 = sbr.rel (0) target = $region13
    $region12: #{tpu_custom_call.1} parent=1 // pred_region
      _
    $region13: #{tpu_custom_call.1} parent=1 // pred_fallthru
      _
    // Predicated region
    $region14: #{tpu_custom_call.1} parent=1 // pred_check
      _
    $region15: #{tpu_custom_call.1} parent=1 // pred_check_branch
      %20 = sbr.rel (0) target = $region17
    $region16: #{tpu_custom_call.1} parent=1 // pred_region
      _
    $region17: #{tpu_custom_call.1} parent=1 // pred_fallthru
      _
    // Predicated region
    $region18: #{tpu_custom_call.1} parent=1 // pred_check
      _
    $region19: #{tpu_custom_call.1} parent=1 // pred_check_branch
      %22 = sbr.rel (0) target = $region21
    $region20: #{tpu_custom_call.1} parent=1 // pred_region
      _
    $region21: #{tpu_custom_call.1} parent=1 // pred_fallthru
      _
    // Predicated region
    $region22: #{tpu_custom_call.1} parent=1 // pred_check
      _
    $region23: #{tpu_custom_call.1} parent=1 // pred_check_branch
      %24 = sbr.rel (0) target = $region25
    $region24: #{tpu_custom_call.1} parent=1 // pred_region
      _
    $region25: #{tpu_custom_call.1} parent=1 // pred_fallthru
      _
    // Predicated region
    $region26: #{tpu_custom_call.1} parent=1 // pred_check
      _
    $region27: #{tpu_custom_call.1} parent=1 // pred_check_branch
      %26 = sbr.rel (0) target = $region29
    $region28: #{tpu_custom_call.1} parent=1 // pred_region
      _
    $region29: #{tpu_custom_call.1} parent=1 // pred_fallthru
      _
    %v27 = vld [vmem:[%s0] sm:$0x3]
    %v28 = vld [vmem:[%s2] sm:$0xff]
    %v29 = vld [vmem:[%s2 + $0x8] sm:$0xff]
    %v30 = vld [vmem:[%s2 + $0x10] sm:$0xff]
    %v31 = vld [vmem:[%s2 + $0x18] sm:$0xff]
    %v32 = vld [vmem:[%s1] sm:$0x3]
    %v33 = vld [vmem:[%s3] sm:$0xff]
    %v34 = vld [vmem:[%s3 + $0x8] sm:$0xff]
    %v35 = vld [vmem:[%s3 + $0x10] sm:$0xff]
    %v36 = vld [vmem:[%s3 + $0x18] sm:$0xff]
    %vm37 = vcmask 130048
    %v39 = vsel %vm37, %v32, 0
    %41 = vmatprep.subr.mxu0 %v34
    %42 = vmatpush1.msra.mxu0 %v33
    %43 = vmatprep.subr.mxu0 %v36
    %44 = vmatpush1.msra.mxu0 %v35
    %45 = vmatprep.subr.mxu0 0.0
    %46 = vmatpush1.msra.mxu0 0.0
    %47 = vmatprep.subr.mxu0 0.0
    %48 = vmatpush1.msra.mxu0 0.0
    %49 = vmatprep.subr.mxu0 0.0
    %50 = vmatpush1.msra.mxu0 0.0
    %51 = vmatprep.subr.mxu0 0.0
    %52 = vmatpush1.msra.mxu0 0.0
    %53 = vmatprep.subr.mxu0 0.0
    %54 = vmatpush1.msra.mxu0 0.0
    %55 = vmatprep.subr.mxu0 0.0
    %56 = vmatpush1.msra.mxu0 0.0
    %57 = vmatprep.subr.mxu0 0.0
    %58 = vmatpush1.msra.mxu0 0.0
    %59 = vmatprep.subr.mxu0 0.0
    %60 = vmatpush1.msra.mxu0 0.0
    %61 = vmatprep.subr.mxu0 0.0
    %62 = vmatpush1.msra.mxu0 0.0
    %63 = vmatprep.subr.mxu0 0.0
    %64 = vmatpush1.msra.mxu0 0.0
    %65 = vmatprep.subr.mxu0 0.0
    %66 = vmatpush1.msra.mxu0 0.0
    %67 = vmatprep.subr.mxu0 0.0
    %68 = vmatpush1.msra.mxu0 0.0
    %69 = vmatprep.subr.mxu0 0.0
    %70 = vmatpush1.msra.mxu0 0.0
    %71 = vmatprep.subr.mxu0 0.0
    %72 = vmatpush1.msra.mxu0 0.0
    %73 = vmatprep.subr.mxu0 0.0
    %74 = vmatpush1.msra.mxu0 0.0
    %75 = vmatprep.subr.mxu0 0.0
    %76 = vmatpush1.msra.mxu0 0.0
    %77 = vmatprep.subr.mxu0 0.0
    %78 = vmatpush1.msra.mxu0 0.0
    %79 = vmatprep.subr.mxu0 0.0
    %80 = vmatpush1.msra.mxu0 0.0
    %81 = vmatprep.subr.mxu0 0.0
    %82 = vmatpush1.msra.mxu0 0.0
    %83 = vmatprep.subr.mxu0 0.0
    %84 = vmatpush1.msra.mxu0 0.0
    %85 = vmatprep.subr.mxu0 0.0
    %86 = vmatpush1.msra.mxu0 0.0
    %87 = vmatprep.subr.mxu0 0.0
    %88 = vmatpush1.msra.mxu0 0.0
    %89 = vmatprep.subr.mxu0 0.0
    %90 = vmatpush1.msra.mxu0 0.0
    %91 = vmatprep.subr.mxu0 0.0
    %92 = vmatpush1.msra.mxu0 0.0
    %93 = vmatprep.subr.mxu0 0.0
    %94 = vmatpush1.msra.mxu0 0.0
    %95 = vmatprep.subr.mxu0 0.0
    %96 = vmatpush1.msra.mxu0 0.0
    %97 = vmatprep.subr.mxu0 0.0
    %98 = vmatpush1.msra.mxu0 0.0
    %99 = vmatprep.subr.mxu0 0.0
    %100 = vmatpush1.msra.mxu0 0.0
    %101 = vmatprep.subr.mxu0 0.0
    %102 = vmatpush1.msra.mxu0 0.0
    %103 = vmatprep.subr.mxu0 0.0
    %104 = vmatpush1.msra.mxu0 0.0
    %105 = vmatprep.mubr.f32.mxu0 0.0
    %106 = vmatmul.mubr.f32.gmra.mrb[0].mxu0 %v39
    %v107 = vpop.f32.mrb[0].mxu0
    %v108 = vadd.f32 0.0, %v107
    %v109 = vpop.f32.mrb[0].mxu0
    %v110 = vadd.f32 0.0, %v109
    %111 = vdwg.mxu0
    %v113 = vsel %vm37, %v27, 0
    %115 = vmatprep.subr.mxu0 %v29
    %116 = vmatpush1.msra.mxu0 %v28
    %117 = vmatprep.subr.mxu0 %v31
    %118 = vmatpush1.msra.mxu0 %v30
    %119 = vmatprep.subr.mxu0 0.0
    %120 = vmatpush1.msra.mxu0 0.0
    %121 = vmatprep.subr.mxu0 0.0
    %122 = vmatpush1.msra.mxu0 0.0
    %123 = vmatprep.subr.mxu0 0.0
    %124 = vmatpush1.msra.mxu0 0.0
    %125 = vmatprep.subr.mxu0 0.0
    %126 = vmatpush1.msra.mxu0 0.0
    %127 = vmatprep.subr.mxu0 0.0
    %128 = vmatpush1.msra.mxu0 0.0
    %129 = vmatprep.subr.mxu0 0.0
    %130 = vmatpush1.msra.mxu0 0.0
    %131 = vmatprep.subr.mxu0 0.0
    %132 = vmatpush1.msra.mxu0 0.0
    %133 = vmatprep.subr.mxu0 0.0
    %134 = vmatpush1.msra.mxu0 0.0
    %135 = vmatprep.subr.mxu0 0.0
    %136 = vmatpush1.msra.mxu0 0.0
    %137 = vmatprep.subr.mxu0 0.0
    %138 = vmatpush1.msra.mxu0 0.0
    %139 = vmatprep.subr.mxu0 0.0
    %140 = vmatpush1.msra.mxu0 0.0
    %141 = vmatprep.subr.mxu0 0.0
    %142 = vmatpush1.msra.mxu0 0.0
    %143 = vmatprep.subr.mxu0 0.0
    %144 = vmatpush1.msra.mxu0 0.0
    %145 = vmatprep.subr.mxu0 0.0
    %146 = vmatpush1.msra.mxu0 0.0
    %147 = vmatprep.subr.mxu0 0.0
    %148 = vmatpush1.msra.mxu0 0.0
    %149 = vmatprep.subr.mxu0 0.0
    %150 = vmatpush1.msra.mxu0 0.0
    %151 = vmatprep.subr.mxu0 0.0
    %152 = vmatpush1.msra.mxu0 0.0
    %153 = vmatprep.subr.mxu0 0.0
    %154 = vmatpush1.msra.mxu0 0.0
    %155 = vmatprep.subr.mxu0 0.0
    %156 = vmatpush1.msra.mxu0 0.0
    %157 = vmatprep.subr.mxu0 0.0
    %158 = vmatpush1.msra.mxu0 0.0
    %159 = vmatprep.subr.mxu0 0.0
    %160 = vmatpush1.msra.mxu0 0.0
    %161 = vmatprep.subr.mxu0 0.0
    %162 = vmatpush1.msra.mxu0 0.0
    %163 = vmatprep.subr.mxu0 0.0
    %164 = vmatpush1.msra.mxu0 0.0
    %165 = vmatprep.subr.mxu0 0.0
    %166 = vmatpush1.msra.mxu0 0.0
    %167 = vmatprep.subr.mxu0 0.0
    %168 = vmatpush1.msra.mxu0 0.0
    %169 = vmatprep.subr.mxu0 0.0
    %170 = vmatpush1.msra.mxu0 0.0
    %171 = vmatprep.subr.mxu0 0.0
    %172 = vmatpush1.msra.mxu0 0.0
    %173 = vmatprep.subr.mxu0 0.0
    %174 = vmatpush1.msra.mxu0 0.0
    %175 = vmatprep.subr.mxu0 0.0
    %176 = vmatpush1.msra.mxu0 0.0
    %177 = vmatprep.subr.mxu0 0.0
    %178 = vmatpush1.msra.mxu0 0.0
    %179 = vmatprep.mubr.f32.mxu0 0.0
    %180 = vmatmul.mubr.f32.gmra.mrb[0].mxu0 %v113
    %v181 = vpop.f32.mrb[0].mxu0
    %v182 = vadd.f32 %v108, %v181
    %v183 = vpop.f32.mrb[0].mxu0
    %v184 = vadd.f32 %v110, %v183
    %185 = vdwg.mxu0
    %v186 = vld [vmem:[%s4] sm:$0x3]
    %v188 = vlaneseq
    %v189 = vshrl.u32 %v188, 7
    %v190 = vsub.s32 0, %v189
    %v191 = vrot.slane %v186, %v190
    %v192 = vlaneseq
    %v193 = vshrl.u32 %v192, 7
    %v194 = vsub.s32 1, %v193
    %v195 = vrot.slane %v186, %v194
    %v198 = vadd.f32 %v182, %v191
    %v199 = vadd.f32 %v184, %v195
    %v200 = vmax.f32 %v198, 0.0
    %v201 = vmax.f32 %v199, 0.0
    %v202 = vld [vmem:[%s5] sm:$0xff]
    %v203 = vld [vmem:[%s5 + $0x8] sm:$0xff]
    %v204 = vld [vmem:[%s5 + $0x10] sm:$0xff]
    %v205 = vld [vmem:[%s5 + $0x18] sm:$0xff]
    %v206 = vld [vmem:[%s5 + $0x20] sm:$0xff]
    %v207 = vld [vmem:[%s5 + $0x28] sm:$0xff]
    %v208 = vld [vmem:[%s5 + $0x30] sm:$0xff]
    %v209 = vld [vmem:[%s5 + $0x38] sm:$0xff]
    %v210 = vld [vmem:[%s5 + $0x40] sm:$0xff]
    %v211 = vld [vmem:[%s5 + $0x48] sm:$0xff]
    %v212 = vld [vmem:[%s5 + $0x50] sm:$0xff]
    %v213 = vld [vmem:[%s5 + $0x58] sm:$0xff]
    %v214 = vld [vmem:[%s5 + $0x60] sm:$0xff]
    %v215 = vld [vmem:[%s5 + $0x68] sm:$0xff]
    %v216 = vld [vmem:[%s5 + $0x70] sm:$0xff]
    %v217 = vld [vmem:[%s5 + $0x78] sm:$0xff]
    %v218 = vld [vmem:[%s5 + $0x80] sm:$0xff]
    %v219 = vld [vmem:[%s5 + $0x88] sm:$0xff]
    %v220 = vld [vmem:[%s5 + $0x90] sm:$0xff]
    %v221 = vld [vmem:[%s5 + $0x98] sm:$0xff]
    %v222 = vld [vmem:[%s5 + $0xa0] sm:$0xff]
    %v223 = vld [vmem:[%s5 + $0xa8] sm:$0xff]
    %v224 = vld [vmem:[%s5 + $0xb0] sm:$0xff]
    %v225 = vld [vmem:[%s5 + $0xb8] sm:$0xff]
    %v226 = vld [vmem:[%s5 + $0xc0] sm:$0xff]
    %v227 = vld [vmem:[%s5 + $0xc8] sm:$0xff]
    %v228 = vld [vmem:[%s5 + $0xd0] sm:$0xff]
    %v229 = vld [vmem:[%s5 + $0xd8] sm:$0xff]
    %v230 = vld [vmem:[%s5 + $0xe0] sm:$0xff]
    %v231 = vld [vmem:[%s5 + $0xe8] sm:$0xff]
    %v232 = vld [vmem:[%s5 + $0xf0] sm:$0xff]
    %v233 = vld [vmem:[%s5 + $0xf8] sm:$0xff]
    %v234 = vld [vmem:[%s6] sm:$0x1]
    %v236 = vlaneseq
    %v237 = vshrl.u32 %v236, 7
    %v238 = vsub.s32 0, %v237
    %v239 = vrot.slane %v234, %v238
    %241 = vmatprep.subr.mxu0 0.0
    %242 = vmatpush1.msra.mxu0 %v202
    %243 = vmatprep.subr.mxu0 0.0
    %244 = vmatpush1.msra.mxu0 %v203
    %245 = vmatprep.subr.mxu0 0.0
    %246 = vmatpush1.msra.mxu0 %v204
    %247 = vmatprep.subr.mxu0 0.0
    %248 = vmatpush1.msra.mxu0 %v205
    %249 = vmatprep.subr.mxu0 0.0
    %250 = vmatpush1.msra.mxu0 %v206
    %251 = vmatprep.subr.mxu0 0.0
    %252 = vmatpush1.msra.mxu0 %v207
    %253 = vmatprep.subr.mxu0 0.0
    %254 = vmatpush1.msra.mxu0 %v208
    %255 = vmatprep.subr.mxu0 0.0
    %256 = vmatpush1.msra.mxu0 %v209
    %257 = vmatprep.subr.mxu0 0.0
    %258 = vmatpush1.msra.mxu0 %v210
    %259 = vmatprep.subr.mxu0 0.0
    %260 = vmatpush1.msra.mxu0 %v211
    %261 = vmatprep.subr.mxu0 0.0
    %262 = vmatpush1.msra.mxu0 %v212
    %263 = vmatprep.subr.mxu0 0.0
    %264 = vmatpush1.msra.mxu0 %v213
    %265 = vmatprep.subr.mxu0 0.0
    %266 = vmatpush1.msra.mxu0 %v214
    %267 = vmatprep.subr.mxu0 0.0
    %268 = vmatpush1.msra.mxu0 %v215
    %269 = vmatprep.subr.mxu0 0.0
    %270 = vmatpush1.msra.mxu0 %v216
    %271 = vmatprep.subr.mxu0 0.0
    %272 = vmatpush1.msra.mxu0 %v217
    %273 = vmatprep.subr.mxu0 0.0
    %274 = vmatpush1.msra.mxu0 %v218
    %275 = vmatprep.subr.mxu0 0.0
    %276 = vmatpush1.msra.mxu0 %v219
    %277 = vmatprep.subr.mxu0 0.0
    %278 = vmatpush1.msra.mxu0 %v220
    %279 = vmatprep.subr.mxu0 0.0
    %280 = vmatpush1.msra.mxu0 %v221
    %281 = vmatprep.subr.mxu0 0.0
    %282 = vmatpush1.msra.mxu0 %v222
    %283 = vmatprep.subr.mxu0 0.0
    %284 = vmatpush1.msra.mxu0 %v223
    %285 = vmatprep.subr.mxu0 0.0
    %286 = vmatpush1.msra.mxu0 %v224
    %287 = vmatprep.subr.mxu0 0.0
    %288 = vmatpush1.msra.mxu0 %v225
    %289 = vmatprep.subr.mxu0 0.0
    %290 = vmatpush1.msra.mxu0 %v226
    %291 = vmatprep.subr.mxu0 0.0
    %292 = vmatpush1.msra.mxu0 %v227
    %293 = vmatprep.subr.mxu0 0.0
    %294 = vmatpush1.msra.mxu0 %v228
    %295 = vmatprep.subr.mxu0 0.0
    %296 = vmatpush1.msra.mxu0 %v229
    %297 = vmatprep.subr.mxu0 0.0
    %298 = vmatpush1.msra.mxu0 %v230
    %299 = vmatprep.subr.mxu0 0.0
    %300 = vmatpush1.msra.mxu0 %v231
    %301 = vmatprep.subr.mxu0 0.0
    %302 = vmatpush1.msra.mxu0 %v232
    %303 = vmatprep.subr.mxu0 0.0
    %304 = vmatpush1.msra.mxu0 %v233
    %305 = vmatprep.mubr.f32.mxu0 %v201
    %306 = vmatmul.mubr.f32.gmra.mrb[0].mxu0 %v200
    %v307 = vpop.f32.mrb[0].mxu0
    %v308 = vadd.f32 %v239, %v307
    %v309 = vpop.f32.mrb[0].mxu0
    %310 = vdwg.mxu0
    %vm311 = vcmask 58368
    %312 = vst.msk [vmem:[#allocation2] sm:$0x3] %vm311, %v308
    // Predicated region
    $region30: #{tpu_custom_call.1} parent=1 // pred_check
      _
    $region31: #{tpu_custom_call.1} parent=1 // pred_check_branch
      %314 = sbr.rel (0) target = $region33
    $region32: #{tpu_custom_call.1} parent=1 // pred_region
      %s316 = ssub.s32 32, 32
      %317 = vsyncadd [#allocation3], %s316
      %s319 = sshll.u32 [#allocation2], 4
      %s320 = int_to_ptr.vmem [resolvable:$true] %s319
      %322 = dma.vmem_to_hbm [thread:$0]  %s320, 32, %s7, [#allocation3]
    $region33: #{tpu_custom_call.1} parent=1 // pred_fallthru
      _
    // Predicated region
    $region34: #{tpu_custom_call.1} parent=1 // pred_check
      _
    $region35: #{tpu_custom_call.1} parent=1 // pred_check_branch
      %324 = sbr.rel (0) target = $region37
    $region36: #{tpu_custom_call.1} parent=1 // pred_region
      %325 = dma.done [#allocation3], 32
    $region37: #{tpu_custom_call.1} parent=1 // pred_fallthru
      _
    %326 = vsyncpa [#allocation3], 1

</llo_original>
